<compile_context>
chip_gen: v5e
topology: v5e:2x2
jax: 0.10.0
libtpu: 0.0.40
codegen_flags: <defaults>
</compile_context>

<pallas_src>
import jax
import jax.numpy as jnp
from jax.experimental import pallas as pl
from jax.experimental.pallas import tpu as pltpu

K = 10        # latent-factor count (v has 10 columns in the torch module)
K_PAD = 128   # pad factors to one full 128-lane vreg; zero cols are exact no-ops


def _round_up(n, m):
    return ((n + m - 1) // m) * m


# ---------------------------------------------------------------------------
# Fused FM kernel: one row-tile of x per grid step.
# ---------------------------------------------------------------------------
def fm_kernel(w0_ref, x_ref, w_ref, s_ref, v_ref, o_ref):
    x = x_ref[...]                                                   # (TB, D) f32
    # ONE D-wide cross-lane reduction covering both the linear term and the
    # "diagonal" correction:  sum_k (x^2 @ v^2)[b,k] == sum_d x^2[b,d] * s[d].
    red = jnp.sum(x * w_ref[...] - 0.5 * (x * x) * s_ref[...],
                  axis=1, keepdims=True)                             # (TB, 1)
    # Single MXU matmul; padded zero columns of v contribute exactly 0.
    xv = jnp.dot(x, v_ref[...], preferred_element_type=jnp.float32)  # (TB, 128)
    o_ref[...] = w0_ref[0] + red + 0.5 * jnp.sum(xv * xv, axis=1, keepdims=True)


def fm_forward(params, x, *, block_rows=512):
    """x: (B, D) -> (B,) float32."""
    if x.dtype != jnp.float32:
        x = x.astype(jnp.float32)
    B, D = x.shape

    # Tiny batches only: pad rows up to one 8-sublane tile (<= 7 extra rows).
    n = B
    if B < 8:
        x = jnp.pad(x, ((0, 8 - B), (0, 0)))
        n = 8

    # Row tile: largest multiple of 8 rows that fits the batch and VMEM budget.
    tb = min(block_rows, (n // 8) * 8)

    def vmem_estimate(tile):
        # double-buffered x / out tiles + weight tables (w_row, s_row, v_pad)
        return 4 * (2 * tile * D + 2 * tile + 2 * (2 * D + D * K_PAD))

    VMEM_BUDGET = 48 << 20          # conservative: v7x has only 64 MiB per TC
    while tb > 8 and vmem_estimate(tb) > VMEM_BUDGET:
        tb = max(8, ((tb // 2) // 8) * 8)

    # v7x megacore: give the 1-D "parallel" grid >= 2 steps when possible so
    # both TensorCores get work (no effect on 1-TC v5e/v6e or tiny batches).
    if n > 16 and pl.cdiv(n, tb) < 2:
        tb = min(tb, max(8, _round_up(pl.cdiv(n, 2), 8)))

    grid = (pl.cdiv(n, tb),)
    vmem_limit = int(min(max(2 * vmem_estimate(tb), 32 << 20), 56 << 20))

    # NOTE: the constant weight blocks (index_map == (0,0)) are never re-DMA'd;
    # single-buffering them (pipeline_mode=pl.Buffered(1)) would shave a little
    # more VMEM if the budget ever gets tight at very large D.
    grid_spec = pltpu.PrefetchScalarGridSpec(
        num_scalar_prefetch=0,
        grid=grid,
        in_specs=[
            pl.BlockSpec(memory_space=pltpu.MemorySpace.SMEM),  # w0 scalar
            pl.BlockSpec((tb, D), lambda i: (i, 0)),            # x row tile
            pl.BlockSpec((1, D), lambda i: (0, 0)),             # w as a row
            pl.BlockSpec((1, D), lambda i: (0, 0)),             # s = sum_k v^2
            pl.BlockSpec((D, K_PAD), lambda i: (0, 0)),         # v (lane-padded)
        ],
        out_specs=pl.BlockSpec((tb, 1), lambda i: (i, 0)),
    )
    out = pl.pallas_call(
        fm_kernel,
        out_shape=jax.ShapeDtypeStruct((n, 1), jnp.float32),
        grid_spec=grid_spec,
        compiler_params=pltpu.CompilerParams(
            dimension_semantics=("parallel",),
            vmem_limit_bytes=vmem_limit),
    )(params["w0"], x, params["w_row"], params["s_row"], params["v_pad"])
    return out[:B, 0]


# ---------------------------------------------------------------------------
# Parameter init (matches the torch __init__) + one-time pre-packing.
# ---------------------------------------------------------------------------
def init_params(key, input_dim):
    # torch: w0 = zeros(1), w = zeros(input_dim), v = xavier_normal_((input_dim, 10))
    std = (2.0 / (input_dim + K)) ** 0.5
    v = jax.random.normal(key, (input_dim, K), jnp.float32) * std
    w0 = jnp.zeros((1,), jnp.float32)
    w = jnp.zeros((input_dim,), jnp.float32)
    # pre-pack once so the forward wrapper is pure dispatch
    v_pad = jnp.zeros((input_dim, K_PAD), jnp.float32).at[:, :K].set(v)
    s_row = jnp.sum(v * v, axis=1).reshape(1, input_dim)   # per-feature sum_k v^2
    return {
        "w0": w0, "w": w, "v": v,                 # canonical torch-shaped params
        "w_row": w.reshape(1, input_dim),         # packed for the kernel
        "s_row": s_row,
        "v_pad": v_pad,
    }


def fm_reference(params, x):
    """Pure-JAX reference mirroring the torch forward (in f32)."""
    x = x.astype(jnp.float32)
    linear = params["w0"][0] + jnp.sum(params["w"] * x, axis=1)
    v = params["v"]
    pair = 0.5 * jnp.sum((x @ v) ** 2 - (x * x) @ (v * v), axis=1)
    return linear + pair


if __name__ == "__main__":
    D = 16
    key = jax.random.PRNGKey(0)
    k_param, k_x, k_x2, k_w0, k_w = jax.random.split(key, 5)

    params = init_params(k_param, D)

    # Small-batch case (B=2): pads to one 8-row tile internally.
    x = jax.random.normal(k_x, (2, D), jnp.float32)
    out = jax.block_until_ready(fm_forward(params, x))
    assert out.shape == (2,), out.shape
    ref = fm_reference(params, x)
    assert jnp.allclose(out, ref, rtol=1e-5, atol=1e-5), (out, ref)

    # Exercise the linear path too (the torch init has w0 = w = 0).
    w_rnd = jax.random.normal(k_w, (D,), jnp.float32)
    params_rnd = dict(params)
    params_rnd["w0"] = jax.random.normal(k_w0, (1,), jnp.float32)
    params_rnd["w"] = w_rnd
    params_rnd["w_row"] = w_rnd.reshape(1, D)
    out2 = jax.block_until_ready(fm_forward(params_rnd, x))
    ref2 = fm_reference(params_rnd, x)
    assert jnp.allclose(out2, ref2, rtol=1e-5, atol=1e-5), (out2, ref2)

    # Multi-tile + ragged last tile + 2-step parallel grid (B=20, tb=16).
    x3 = jax.random.normal(k_x2, (20, D), jnp.float32)
    out3 = jax.block_until_ready(fm_forward(params_rnd, x3))
    ref3 = fm_reference(params_rnd, x3)
    assert out3.shape == (20,), out3.shape
    assert jnp.allclose(out3, ref3, rtol=1e-5, atol=1e-5), (out3, ref3)

    print("KERNEL_OK")
</pallas_src>

<mosaic_0001>
module attributes {stable_mosaic.version = 11 : i64} {
  func.func @fm_kernel(%arg0: i32, %arg1: memref<1xf32, #tpu.memory_space<smem>>, %arg2: memref<8x16xf32, #tpu.memory_space<vmem>>, %arg3: memref<1x16xf32, #tpu.memory_space<vmem>>, %arg4: memref<1x16xf32, #tpu.memory_space<vmem>>, %arg5: memref<16x128xf32, #tpu.memory_space<vmem>>, %arg6: memref<8x1xf32, #tpu.memory_space<vmem>>) attributes {dimension_semantics = [#tpu.dimension_semantics<parallel>], iteration_bounds = array<i64: 1>, scalar_prefetch = 0 : i64, scratch_operands = 0 : i64, tpu.core_type = #tpu.core_type<tc>, window_params = [{transform_indices = @transform_0, window_bounds = array<i64: 1>}, {transform_indices = @transform_1, window_bounds = array<i64: 8, 16>}, {pipeline_mode = #tpu.pipeline_mode<synchronous>, transform_indices = @transform_2, window_bounds = array<i64: 1, 16>}, {pipeline_mode = #tpu.pipeline_mode<synchronous>, transform_indices = @transform_3, window_bounds = array<i64: 1, 16>}, {pipeline_mode = #tpu.pipeline_mode<synchronous>, transform_indices = @transform_4, window_bounds = array<i64: 16, 128>}, {transform_indices = @transform_5, window_bounds = array<i64: 8, 1>}]} {
    %c0 = arith.constant 0 : index
    %c0_0 = arith.constant 0 : index
    %0 = vector.load %arg2[%c0, %c0_0] : memref<8x16xf32, #tpu.memory_space<vmem>>, vector<8x16xf32>
    %c0_1 = arith.constant 0 : index
    %c0_2 = arith.constant 0 : index
    %1 = vector.load %arg3[%c0_1, %c0_2] : memref<1x16xf32, #tpu.memory_space<vmem>>, vector<1x16xf32>
    %2 = vector.broadcast %1 : vector<1x16xf32> to vector<8x16xf32>
    %3 = arith.mulf %0, %2 : vector<8x16xf32>
    %4 = arith.mulf %0, %0 : vector<8x16xf32>
    %cst = arith.constant 5.000000e-01 : f32
    %5 = vector.broadcast %cst : f32 to vector<8x16xf32>
    %6 = arith.mulf %5, %4 : vector<8x16xf32>
    %c0_3 = arith.constant 0 : index
    %c0_4 = arith.constant 0 : index
    %7 = vector.load %arg4[%c0_3, %c0_4] : memref<1x16xf32, #tpu.memory_space<vmem>>, vector<1x16xf32>
    %8 = vector.broadcast %7 : vector<1x16xf32> to vector<8x16xf32>
    %9 = arith.mulf %6, %8 : vector<8x16xf32>
    %10 = arith.subf %3, %9 : vector<8x16xf32>
    %cst_5 = arith.constant dense<0.000000e+00> : vector<8xf32>
    %11 = vector.multi_reduction <add>, %10, %cst_5 [1] : vector<8x16xf32> to vector<8xf32>
    %12 = vector.shape_cast %11 : vector<8xf32> to vector<8x1xf32>
    %c0_6 = arith.constant 0 : index
    %c0_7 = arith.constant 0 : index
    %13 = vector.load %arg5[%c0_6, %c0_7] : memref<16x128xf32, #tpu.memory_space<vmem>>, vector<16x128xf32>
    %cst_8 = arith.constant dense<0.000000e+00> : vector<8x128xf32>
    %14 = tpu.matmul %0, %13, %cst_8 {dimension_numbers = #tpu.dot_dimension_numbers<[1], [0], [0], [1], [0, 0, 1, 1], [], []>} : vector<8x16xf32>, vector<16x128xf32>, vector<8x128xf32> -> vector<8x128xf32>
    %c0_9 = arith.constant 0 : index
    %15 = memref.load %arg1[%c0_9] : memref<1xf32, #tpu.memory_space<smem>>
    %16 = vector.broadcast %15 : f32 to vector<8x1xf32>
    %17 = arith.addf %16, %12 : vector<8x1xf32>
    %18 = arith.mulf %14, %14 : vector<8x128xf32>
    %cst_10 = arith.constant dense<0.000000e+00> : vector<8xf32>
    %19 = vector.multi_reduction <add>, %18, %cst_10 [1] : vector<8x128xf32> to vector<8xf32>
    %20 = vector.shape_cast %19 : vector<8xf32> to vector<8x1xf32>
    %cst_11 = arith.constant 5.000000e-01 : f32
    %21 = vector.broadcast %cst_11 : f32 to vector<8x1xf32>
    %22 = arith.mulf %21, %20 : vector<8x1xf32>
    %23 = arith.addf %17, %22 : vector<8x1xf32>
    %c0_12 = arith.constant 0 : index
    %c0_13 = arith.constant 0 : index
    %24 = vector.load %arg6[%c0_12, %c0_13] : memref<8x1xf32, #tpu.memory_space<vmem>>, vector<8x1xf32>
    tpu.vector_store %arg6[%c0_12, %c0_13], %23 {strides = array<i32>} : memref<8x1xf32, #tpu.memory_space<vmem>>, vector<8x1xf32>,
    return
  }
  func.func @transform_0(%arg0: i32) -> i32 {
    %c0_i32 = arith.constant 0 : i32
    %c0_i32_0 = arith.constant 0 : i32
    return %c0_i32 : i32
  }
  func.func @transform_1(%arg0: i32) -> (i32, i32) {
    %c0_i32 = arith.constant 0 : i32
    %c0_i32_0 = arith.constant 0 : i32
    return %arg0, %c0_i32 : i32, i32
  }
  func.func @transform_2(%arg0: i32) -> (i32, i32) {
    %c0_i32 = arith.constant 0 : i32
    %c0_i32_0 = arith.constant 0 : i32
    %c0_i32_1 = arith.constant 0 : i32
    return %c0_i32, %c0_i32_0 : i32, i32
  }
  func.func @transform_3(%arg0: i32) -> (i32, i32) {
    %c0_i32 = arith.constant 0 : i32
    %c0_i32_0 = arith.constant 0 : i32
    %c0_i32_1 = arith.constant 0 : i32
    return %c0_i32, %c0_i32_0 : i32, i32
  }
  func.func @transform_4(%arg0: i32) -> (i32, i32) {
    %c0_i32 = arith.constant 0 : i32
    %c0_i32_0 = arith.constant 0 : i32
    %c0_i32_1 = arith.constant 0 : i32
    return %c0_i32, %c0_i32_0 : i32, i32
  }
  func.func @transform_5(%arg0: i32) -> (i32, i32) {
    %c0_i32 = arith.constant 0 : i32
    %c0_i32_0 = arith.constant 0 : i32
    return %arg0, %c0_i32 : i32, i32
  }
}

</mosaic_0001>

<llo_original>
// kernel: tpu_custom_call.1
$region0: #{tpu_custom_call.1}
  #allocation0 [shape = 'u32[]', space=smem, size = 0x4, offset = 0x4, fixed_abs, tag = 'smem constant byte address 0x4 - core index']
  #allocation1 [shape = 'u32[72,128]{1,0:T(1,128)}', space=vmem, size = 0x9000, scoped, tag = 'internal scratch']
  #allocation2 [shape = 'f32[1]{0:T(128)S(6)}', space=smem, size = 0x200, scoped, tag = 'scoped memory for tpu_custom_call.1']
  %s0 = inlined_call_operand.<no memory space> [shape: f32[1], index: 0, kind: input, shape index: {}]
  %s1 = inlined_call_operand.hbm [shape: f32[8,16], index: 1, kind: input, shape index: {}]
  %s2 = inlined_call_operand.vmem [shape: f32[1,16], index: 2, kind: input, shape index: {}]
  %s3 = inlined_call_operand.vmem [shape: f32[1,16], index: 3, kind: input, shape index: {}]
  %s4 = inlined_call_operand.hbm [shape: f32[16,128], index: 4, kind: input, shape index: {}]
  %s5 = inlined_call_operand.vmem [shape: f32[8,1], index: 5, kind: output, shape index: {}]
  %s6 = sld [smem:[#allocation0]]
  $region38: #{tpu_custom_call.1} parent=0
    _
  %s8 = ssub.s32 1, %s6
  %s9 = scalar_select 0, %s8, %s6
  %10 = sst [smem:[#allocation2]] %s0
  $region1: #{tpu_custom_call.1} parent=0
    #allocation3 [shape = 'u8[4096]{0}', space=vmem, size = 0x1000, scoped, tag = 'input window, operand 1, single buffered']
    #allocation4 [shape = 's32[1]{0}', space=sflag, size = 0x4, scoped, tag = 'scoped memory for tpu_custom_call.1']
    #allocation5 [shape = 'u8[8192]{0}', space=vmem, size = 0x2000, scoped, tag = 'input window, operand 4, single buffered']
    #allocation6 [shape = 's32[1]{0}', space=sflag, size = 0x4, scoped, tag = 'scoped memory for tpu_custom_call.1']
    %11 = vsyncpa [#allocation4], 0
    %12 = vsyncpa [#allocation6], 0
    // Predicated region
    $region2: #{tpu_custom_call.1} parent=1 // pred_check
      _
    $region3: #{tpu_custom_call.1} parent=1 // pred_check_branch
      %14 = sbr.rel (0) target = $region5
    $region4: #{tpu_custom_call.1} parent=1 // pred_region
      _
    $region5: #{tpu_custom_call.1} parent=1 // pred_fallthru
      _
    // Predicated region
    $region6: #{tpu_custom_call.1} parent=1 // pred_check
      _
    $region7: #{tpu_custom_call.1} parent=1 // pred_check_branch
      %16 = sbr.rel (0) target = $region9
    $region8: #{tpu_custom_call.1} parent=1 // pred_region
      %18 = vsyncadd [#allocation4], 0
      %s20 = sshll.u32 %s1, 4
      %s21 = int_to_ptr.hbm [resolvable:$true] %s20
      %s22 = sshll.u32 [#allocation3], 4
      %s23 = int_to_ptr.vmem [resolvable:$true] %s22
      %25 = dma.hbm_to_vmem [thread:$0]  %s21, 128, %s23, [#allocation4]
    $region9: #{tpu_custom_call.1} parent=1 // pred_fallthru
      _
    // Predicated region
    $region10: #{tpu_custom_call.1} parent=1 // pred_check
      _
    $region11: #{tpu_custom_call.1} parent=1 // pred_check_branch
      %27 = sbr.rel (0) target = $region13
    $region12: #{tpu_custom_call.1} parent=1 // pred_region
      _
    $region13: #{tpu_custom_call.1} parent=1 // pred_fallthru
      _
    // Predicated region
    $region14: #{tpu_custom_call.1} parent=1 // pred_check
      _
    $region15: #{tpu_custom_call.1} parent=1 // pred_check_branch
      %29 = sbr.rel (0) target = $region17
    $region16: #{tpu_custom_call.1} parent=1 // pred_region
      _
    $region17: #{tpu_custom_call.1} parent=1 // pred_fallthru
      _
    // Predicated region
    $region18: #{tpu_custom_call.1} parent=1 // pred_check
      _
    $region19: #{tpu_custom_call.1} parent=1 // pred_check_branch
      %31 = sbr.rel (0) target = $region21
    $region20: #{tpu_custom_call.1} parent=1 // pred_region
      %33 = vsyncadd [#allocation6], 0
      %s34 = sshll.u32 %s4, 4
      %s35 = int_to_ptr.hbm [resolvable:$true] %s34
      %s36 = sshll.u32 [#allocation5], 4
      %s37 = int_to_ptr.vmem [resolvable:$true] %s36
      %42 = dma.hbm_to_vmem [thread:$0]  %s35, 256, %s37, [#allocation6], 128, 128, 8
    $region21: #{tpu_custom_call.1} parent=1 // pred_fallthru
      _
    // Predicated region
    $region22: #{tpu_custom_call.1} parent=1 // pred_check
      _
    $region23: #{tpu_custom_call.1} parent=1 // pred_check_branch
      %44 = sbr.rel (0) target = $region25
    $region24: #{tpu_custom_call.1} parent=1 // pred_region
      %46 = dma.done [#allocation4], 128
    $region25: #{tpu_custom_call.1} parent=1 // pred_fallthru
      _
    // Predicated region
    $region26: #{tpu_custom_call.1} parent=1 // pred_check
      _
    $region27: #{tpu_custom_call.1} parent=1 // pred_check_branch
      %48 = sbr.rel (0) target = $region29
    $region28: #{tpu_custom_call.1} parent=1 // pred_region
      %50 = dma.done [#allocation6], 256
    $region29: #{tpu_custom_call.1} parent=1 // pred_fallthru
      _
    %v51 = vld [vmem:[#allocation3] sm:$0xff]
    %v52 = vld [vmem:[%s2] sm:$0x1]
    %v54 = vperm.slane %v52, 0
    %v56 = vmul.f32 %v51, %v54
    %v57 = vmul.f32 %v51, %v51
    %v58 = vmul.f32 %v57, 0.5
    %v59 = vld [vmem:[%s3] sm:$0x1]
    %v61 = vperm.slane %v59, 0
    %v63 = vmul.f32 %v58, %v61
    %v64 = vsub.f32 %v56, %v63
    %vm65 = vcmask 130048
    %v66 = vsel %vm65, %v64, 0.0
    %67 = vadd.xlane.f32.xlu0 %v66
    %v68 = vpop.xlane.xlu0 %67
    %v69 = vld [vmem:[#allocation5] sm:$0xff]
    %v70 = vld [vmem:[#allocation5 + $0x8] sm:$0xff]
    %v72 = vsel %vm65, %v51, 0
    %74 = vmatpush.msra.mxu0 0.0
    %75 = vmatpush.msra.mxu0 0.0
    %76 = vmatpush.msra.mxu0 0.0
    %77 = vmatpush.msra.mxu0 0.0
    %78 = vmatpush.msra.mxu0 0.0
    %79 = vmatpush.msra.mxu0 0.0
    %80 = vmatpush.msra.mxu0 0.0
    %81 = vmatpush.msra.mxu0 0.0
    %82 = vmatpush.msra.mxu0 0.0
    %83 = vmatpush.msra.mxu0 0.0
    %84 = vmatpush.msra.mxu0 0.0
    %85 = vmatpush.msra.mxu0 0.0
    %86 = vmatpush.msra.mxu0 0.0
    %87 = vmatpush.msra.mxu0 0.0
    %88 = vmatpush.msra.mxu0 %v70
    %89 = vmatpush.msra.mxu0 %v69
    %90 = vmatmul.f32.gmra.mxu0 %v72
    %v91 = vpop.f32.mrf.mxu0
    %v92 = vadd.f32 0.0, %v91
    %93 = vdwg.mxu0
    %s94 = sld [smem:[#allocation2]]
    %v95 = vstv %s94
    %v96 = vadd.f32 %v95, %v68
    %v97 = vmul.f32 %v92, %v92
    %98 = vadd.xlane.f32.xlu0 %v97
    %v99 = vpop.xlane.xlu0 %98
    %v100 = vmul.f32 %v99, 0.5
    %v101 = vadd.f32 %v96, %v100
    %vm102 = vcmask 7168
    %103 = vst.msk [vmem:[%s5] sm:$0xff] %vm102, %v101
    // Predicated region
    $region30: #{tpu_custom_call.1} parent=1 // pred_check
      _
    $region31: #{tpu_custom_call.1} parent=1 // pred_check_branch
      %105 = sbr.rel (0) target = $region33
    $region32: #{tpu_custom_call.1} parent=1 // pred_region
      _
    $region33: #{tpu_custom_call.1} parent=1 // pred_fallthru
      _
    // Predicated region
    $region34: #{tpu_custom_call.1} parent=1 // pred_check
      _
    $region35: #{tpu_custom_call.1} parent=1 // pred_check_branch
      %107 = sbr.rel (0) target = $region37
    $region36: #{tpu_custom_call.1} parent=1 // pred_region
      _
    $region37: #{tpu_custom_call.1} parent=1 // pred_fallthru
      _
    %108 = vsyncpa [#allocation4], 1
    %109 = vsyncpa [#allocation6], 1

</llo_original>
